<compile_context>
chip_gen: v7x
topology: tpu7x:2x2x1
jax: 0.10.0
libtpu: 0.0.40
codegen_flags: <defaults>
</compile_context>

<pallas_src>
import math

import jax
import jax.numpy as jnp
from jax import lax
from jax.experimental import pallas as pl
from jax.experimental.pallas import tpu as pltpu

MASK_VALUE = -1e30  # finite "−inf": exp(MASK - m) underflows to 0, never NaN


def _round_up(v, m):
    return (v + m - 1) // m * m


def _pick_row_tile(m):
    # Prefer big, bf16-friendly (multiple of 16) row tiles; fall back to full M.
    for cand in (512, 256, 128, 64, 32, 16):
        if m % cand == 0:
            return cand
    return m


def masked_self_attention(x, wq, wk, wv, bq, bk, bv):
    """x: (B, T, H) f32. w*: (H, H) in PyTorch (out, in) layout. b*: (H,)."""
    B, T, H = x.shape
    Hp = max(128, _round_up(H, 128))          # lane-dense hidden dim
    blk = 128 if T >= 128 else _round_up(T, 8)  # seq tile (tq == tkv)
    Tp = _round_up(T, blk)
    scale = 1.0 / math.sqrt(H)                # uses the *original* H

    # ---------------- parameter glue (done once, outside the hot kernels) ----
    def prep_w(w):  # (out, in) -> (in, out), zero-pad to (Hp, Hp)
        return jnp.pad(w.T, ((0, Hp - H), (0, Hp - H)))

    def prep_b(b):
        return jnp.pad(b, (0, Hp - H))

    wqkv = jnp.concatenate([prep_w(wq), prep_w(wk), prep_w(wv)],
                           axis=1).astype(jnp.bfloat16)          # (Hp, 3Hp) bf16
    bqkv = jnp.concatenate([prep_b(bq), prep_b(bk), prep_b(bv)]
                           ).reshape(1, 3 * Hp).astype(jnp.float32)

    # activations: pad T and H, collapse B*T onto rows, bf16 matmul operand
    xp = jnp.pad(x, ((0, 0), (0, Tp - T), (0, Hp - H))).astype(jnp.bfloat16)
    M = B * Tp
    x2d = xp.reshape(M, Hp)
    tm = _pick_row_tile(M)

    # ---------------- kernel 1: fused QKV projection --------------------------
    def qkv_kernel(x_ref, w_ref, b_ref, o_ref):
        # (tm, Hp)bf16 @ (Hp, 3Hp)bf16 -> f32 accumulate, + f32 bias
        y = jnp.dot(x_ref[...], w_ref[...],
                    preferred_element_type=jnp.float32) + b_ref[...]
        # fold 1/sqrt(H) into q once; stores are 128-lane aligned slices
        o_ref[:, :Hp] = (y[:, :Hp] * scale).astype(o_ref.dtype)
        o_ref[:, Hp:] = y[:, Hp:].astype(o_ref.dtype)

    qkv = pl.pallas_call(
        qkv_kernel,
        out_shape=jax.ShapeDtypeStruct((M, 3 * Hp), jnp.bfloat16),
        grid_spec=pltpu.PrefetchScalarGridSpec(
            num_scalar_prefetch=0,
            grid=(M // tm,),
            in_specs=[
                pl.BlockSpec((tm, Hp), lambda i: (i, 0)),
                pl.BlockSpec((Hp, 3 * Hp), lambda i: (0, 0)),   # constant block
                pl.BlockSpec((1, 3 * Hp), lambda i: (0, 0)),
            ],
            out_specs=pl.BlockSpec((tm, 3 * Hp), lambda i: (i, 0)),
        ),
        compiler_params=pltpu.CompilerParams(
            dimension_semantics=("parallel",),
            vmem_limit_bytes=48 * 1024 * 1024),
    )(x2d, wqkv, bqkv)

    qkv3 = qkv.reshape(B, Tp, 3 * Hp)

    # ---------------- kernel 2: flash (online-softmax) causal attention -------
    tq = tkv = blk
    nq = Tp // tq
    nkv = Tp // tkv

    def flash_kernel(q_ref, k_ref, v_ref, o_ref, m_sc, l_sc, acc_sc):
        ki = pl.program_id(2)
        q_start = pl.program_id(1) * tq
        kv_start = ki * tkv

        @pl.when(ki == 0)
        def _():
            m_sc[...] = jnp.full_like(m_sc, MASK_VALUE)
            l_sc[...] = jnp.zeros_like(l_sc)
            acc_sc[...] = jnp.zeros_like(acc_sc)

        # causal block skip: kv blocks strictly above the diagonal do nothing
        @pl.when(kv_start < q_start + tq)
        def _():
            q = q_ref[0]                       # (tq, Hp) bf16 (already scaled)
            k = k_ref[0]                       # (tkv, Hp) bf16
            s = lax.dot_general(q, k, (((1,), (1,)), ((), ())),
                                preferred_element_type=jnp.float32)  # (tq,tkv) f32
            row = q_start + lax.broadcasted_iota(jnp.int32, (tq, tkv), 0)
            col = kv_start + lax.broadcasted_iota(jnp.int32, (tq, tkv), 1)
            s = jnp.where(row >= col, s, MASK_VALUE)

            m_prev = m_sc[...]
            m_next = jnp.maximum(m_prev, jnp.max(s, axis=-1, keepdims=True))
            alpha = jnp.exp(m_prev - m_next)                  # f32
            p = jnp.exp(s - m_next)                           # f32
            l_sc[...] = alpha * l_sc[...] + jnp.sum(p, axis=-1, keepdims=True)
            acc_sc[...] = alpha * acc_sc[...] + jnp.dot(
                p.astype(jnp.bfloat16), v_ref[0],
                preferred_element_type=jnp.float32)
            m_sc[...] = m_next

        @pl.when(ki == pl.num_programs(2) - 1)
        def _():
            inv_l = pl.reciprocal(l_sc[...], approx=True)     # EUP, off the VALU
            o_ref[0] = (acc_sc[...] * inv_l).astype(o_ref.dtype)

    out_p = pl.pallas_call(
        flash_kernel,
        out_shape=jax.ShapeDtypeStruct((B, Tp, Hp), x.dtype),
        grid_spec=pltpu.PrefetchScalarGridSpec(
            num_scalar_prefetch=0,
            grid=(B, nq, nkv),
            in_specs=[
                pl.BlockSpec((1, tq, Hp), lambda b, qi, ki: (b, qi, 0)),   # q
                pl.BlockSpec((1, tkv, Hp), lambda b, qi, ki: (b, ki, 1)),  # k
                pl.BlockSpec((1, tkv, Hp), lambda b, qi, ki: (b, ki, 2)),  # v
            ],
            out_specs=pl.BlockSpec((1, tq, Hp), lambda b, qi, ki: (b, qi, 0)),
            scratch_shapes=[
                pltpu.VMEM((tq, 1), jnp.float32),   # running max m
                pltpu.VMEM((tq, 1), jnp.float32),   # running denom l
                pltpu.VMEM((tq, Hp), jnp.float32),  # output accumulator
            ],
        ),
        compiler_params=pltpu.CompilerParams(
            # two parallel axes -> both v7x TensorCores get work even at B=1
            dimension_semantics=("parallel", "parallel", "arbitrary"),
            vmem_limit_bytes=48 * 1024 * 1024),
    )(qkv3, qkv3, qkv3)

    return out_p[:, :T, :H]


def _reference(x, wq, wk, wv, bq, bk, bv):
    """Pure-JAX f32 reference matching the PyTorch forward exactly."""
    B, T, H = x.shape
    q = x @ wq.T + bq
    k = x @ wk.T + bk
    v = x @ wv.T + bv
    att = jnp.einsum("btd,bsd->bts", q, k) / math.sqrt(H)
    mask = jnp.tril(jnp.ones((T, T)))[None] == 0
    att = jnp.where(mask, -jnp.inf, att)
    w = jax.nn.softmax(att, axis=-1)
    return jnp.einsum("bts,bsd->btd", w, v)


if __name__ == "__main__":
    B, T, H = 2, 8, 32          # batch, seq (block_size), hidden
    key = jax.random.PRNGKey(0)
    kx, kq, kk, kv, kbq, kbk, kbv = jax.random.split(key, 7)

    bound = 1.0 / math.sqrt(H)  # PyTorch nn.Linear-style uniform bound
    x = jax.random.normal(kx, (B, T, H), dtype=jnp.float32)
    wq = jax.random.uniform(kq, (H, H), jnp.float32, -bound, bound)
    wk = jax.random.uniform(kk, (H, H), jnp.float32, -bound, bound)
    wv = jax.random.uniform(kv, (H, H), jnp.float32, -bound, bound)
    bq = jax.random.uniform(kbq, (H,), jnp.float32, -bound, bound)
    bk = jax.random.uniform(kbk, (H,), jnp.float32, -bound, bound)
    bv = jax.random.uniform(kbv, (H,), jnp.float32, -bound, bound)

    out = masked_self_attention(x, wq, wk, wv, bq, bk, bv)
    out = jax.block_until_ready(out)

    ref = _reference(x, wq, wk, wv, bq, bk, bv)
    assert out.shape == (B, T, H)
    # bf16 matmul operands (f32 accumulation) -> loosen vs the pure-f32 reference
    assert jnp.allclose(out, ref, atol=3e-2, rtol=3e-2), "mismatch vs reference"

    print("KERNEL_OK")
</pallas_src>

<mosaic_0001>
module attributes {stable_mosaic.version = 11 : i64} {
  func.func @qkv_kernel(%arg0: i32, %arg1: memref<16x128xbf16, #tpu.memory_space<vmem>>, %arg2: memref<128x384xbf16, #tpu.memory_space<vmem>>, %arg3: memref<1x384xf32, #tpu.memory_space<vmem>>, %arg4: memref<16x384xbf16, #tpu.memory_space<vmem>>) attributes {dimension_semantics = [#tpu.dimension_semantics<parallel>], iteration_bounds = array<i64: 1>, scalar_prefetch = 0 : i64, scratch_operands = 0 : i64, tpu.core_type = #tpu.core_type<tc>, window_params = [{transform_indices = @transform_0, window_bounds = array<i64: 16, 128>}, {pipeline_mode = #tpu.pipeline_mode<synchronous>, transform_indices = @transform_1, window_bounds = array<i64: 128, 384>}, {pipeline_mode = #tpu.pipeline_mode<synchronous>, transform_indices = @transform_2, window_bounds = array<i64: 1, 384>}, {transform_indices = @transform_3, window_bounds = array<i64: 16, 384>}]} {
    %c0 = arith.constant 0 : index
    %c0_0 = arith.constant 0 : index
    %0 = vector.load %arg1[%c0, %c0_0] : memref<16x128xbf16, #tpu.memory_space<vmem>>, vector<16x128xbf16>
    %c0_1 = arith.constant 0 : index
    %c0_2 = arith.constant 0 : index
    %1 = vector.load %arg2[%c0_1, %c0_2] : memref<128x384xbf16, #tpu.memory_space<vmem>>, vector<128x384xbf16>
    %cst = arith.constant dense<0.000000e+00> : vector<16x384xf32>
    %2 = tpu.matmul %0, %1, %cst {dimension_numbers = #tpu.dot_dimension_numbers<[1], [0], [0], [1], [0, 0, 1, 1], [], []>} : vector<16x128xbf16>, vector<128x384xbf16>, vector<16x384xf32> -> vector<16x384xf32>
    %c0_3 = arith.constant 0 : index
    %c0_4 = arith.constant 0 : index
    %3 = vector.load %arg3[%c0_3, %c0_4] : memref<1x384xf32, #tpu.memory_space<vmem>>, vector<1x384xf32>
    %4 = vector.broadcast %3 : vector<1x384xf32> to vector<16x384xf32>
    %5 = arith.addf %2, %4 : vector<16x384xf32>
    %6 = vector.extract_strided_slice %5 {offsets = [0, 0], sizes = [16, 128], strides = [1, 1]} : vector<16x384xf32> to vector<16x128xf32>
    %cst_5 = arith.constant 0.176776692 : f32
    %7 = vector.broadcast %cst_5 : f32 to vector<16x128xf32>
    %8 = arith.mulf %6, %7 : vector<16x128xf32>
    %9 = arith.truncf %8 : vector<16x128xf32> to vector<16x128xbf16>
    %c0_6 = arith.constant 0 : index
    %c0_7 = arith.constant 0 : index
    %10 = vector.load %arg4[%c0_6, %c0_7] : memref<16x384xbf16, #tpu.memory_space<vmem>>, vector<16x128xbf16>
    tpu.vector_store %arg4[%c0_6, %c0_7], %9 {strides = array<i32>} : memref<16x384xbf16, #tpu.memory_space<vmem>>, vector<16x128xbf16>,
    %11 = vector.extract_strided_slice %5 {offsets = [0, 128], sizes = [16, 256], strides = [1, 1]} : vector<16x384xf32> to vector<16x256xf32>
    %12 = arith.truncf %11 : vector<16x256xf32> to vector<16x256xbf16>
    %c0_8 = arith.constant 0 : index
    %c128 = arith.constant 128 : index
    %13 = vector.load %arg4[%c0_8, %c128] : memref<16x384xbf16, #tpu.memory_space<vmem>>, vector<16x256xbf16>
    tpu.vector_store %arg4[%c0_8, %c128], %12 {strides = array<i32>} : memref<16x384xbf16, #tpu.memory_space<vmem>>, vector<16x256xbf16>,
    return
  }
  func.func @transform_0(%arg0: i32) -> (i32, i32) {
    %c0_i32 = arith.constant 0 : i32
    %c0_i32_0 = arith.constant 0 : i32
    return %arg0, %c0_i32 : i32, i32
  }
  func.func @transform_1(%arg0: i32) -> (i32, i32) {
    %c0_i32 = arith.constant 0 : i32
    %c0_i32_0 = arith.constant 0 : i32
    %c0_i32_1 = arith.constant 0 : i32
    return %c0_i32, %c0_i32_0 : i32, i32
  }
  func.func @transform_2(%arg0: i32) -> (i32, i32) {
    %c0_i32 = arith.constant 0 : i32
    %c0_i32_0 = arith.constant 0 : i32
    %c0_i32_1 = arith.constant 0 : i32
    return %c0_i32, %c0_i32_0 : i32, i32
  }
  func.func @transform_3(%arg0: i32) -> (i32, i32) {
    %c0_i32 = arith.constant 0 : i32
    %c0_i32_0 = arith.constant 0 : i32
    return %arg0, %c0_i32 : i32, i32
  }
}

</mosaic_0001>

<llo_original>
// kernel: tpu_custom_call.1
$region0: #{tpu_custom_call.1}
  #allocation0 [shape = 'u32[]', space=smem, size = 0x4, offset = 0x4, fixed_abs, tag = 'smem constant byte address 0x4 - core index']
  #allocation1 [shape = 'u32[144,128]{1,0:T(1,128)}', space=vmem, size = 0x12000, scoped, tag = 'internal scratch']
  %s0 = inlined_call_operand.hbm [shape: bf16[16,128], index: 0, kind: input, shape index: {}]
  %s1 = inlined_call_operand.hbm [shape: bf16[128,384], index: 1, kind: input, shape index: {}]
  %s2 = inlined_call_operand.vmem [shape: f32[1,384], index: 2, kind: input, shape index: {}]
  %s3 = inlined_call_operand.hbm [shape: bf16[16,384], index: 3, kind: output, shape index: {}]
  %s4 = sld [smem:[#allocation0]]
  $region30: #{tpu_custom_call.1} parent=0
    _
  %s6 = ssub.s32 1, %s4
  %s7 = scalar_select 0, %s6, %s4
  $region1: #{tpu_custom_call.1} parent=0
    #allocation2 [shape = 'u8[4096]{0}', space=vmem, size = 0x1000, scoped, tag = 'input window, operand 0, single buffered']
    #allocation3 [shape = 's32[1]{0}', space=sflag, size = 0x4, scoped, tag = 'scoped memory for tpu_custom_call.1']
    #allocation4 [shape = 's32[1]{0}', space=sflag, size = 0x4, scoped, tag = 'scoped memory for tpu_custom_call.1']
    #allocation5 [shape = 'u8[98304]{0}', space=vmem, size = 0x18000, scoped, tag = 'input window, operand 1, single buffered']
    #allocation6 [shape = 's32[1]{0}', space=sflag, size = 0x4, scoped, tag = 'scoped memory for tpu_custom_call.1']
    #allocation7 [shape = 'u8[12288]{0}', space=vmem, size = 0x3000, scoped, tag = 'output window, operand 0, single buffered']
    %8 = vsyncpa [#allocation3], 0
    %9 = vsyncpa [#allocation6], 0
    %10 = vsyncpa [#allocation4], 0
    // Predicated region
    $region2: #{tpu_custom_call.1} parent=1 // pred_check
      _
    $region3: #{tpu_custom_call.1} parent=1 // pred_check_branch
      %12 = sbr.rel (0) target = $region5
    $region4: #{tpu_custom_call.1} parent=1 // pred_region
      %s14 = ssub.s32 128, 128
      %15 = vsyncadd [#allocation3], %s14
      %s16 = sshll.u32 [#allocation2], 4
      %s17 = int_to_ptr.vmem [resolvable:$true] %s16
      %22 = dma.hbm_to_vmem [thread:$0]  %s0, 128, %s17, [#allocation3], 64, 64, 4
    $region5: #{tpu_custom_call.1} parent=1 // pred_fallthru
      _
    // Predicated region
    $region6: #{tpu_custom_call.1} parent=1 // pred_check
      _
    $region7: #{tpu_custom_call.1} parent=1 // pred_check_branch
      %24 = sbr.rel (0) target = $region9
    $region8: #{tpu_custom_call.1} parent=1 // pred_region
      %s26 = ssub.s32 3072, 3072
      %27 = vsyncadd [#allocation6], %s26
      %s28 = sshll.u32 [#allocation5], 4
      %s29 = int_to_ptr.vmem [resolvable:$true] %s28
      %34 = dma.hbm_to_vmem [thread:$0]  %s1, 3072, %s29, [#allocation6], 192, 192, 12
    $region9: #{tpu_custom_call.1} parent=1 // pred_fallthru
      _
    // Predicated region
    $region10: #{tpu_custom_call.1} parent=1 // pred_check
      _
    $region11: #{tpu_custom_call.1} parent=1 // pred_check_branch
      %36 = sbr.rel (0) target = $region13
    $region12: #{tpu_custom_call.1} parent=1 // pred_region
      _
    $region13: #{tpu_custom_call.1} parent=1 // pred_fallthru
      _
    // Predicated region
    $region14: #{tpu_custom_call.1} parent=1 // pred_check
      _
    $region15: #{tpu_custom_call.1} parent=1 // pred_check_branch
      %38 = sbr.rel (0) target = $region17
    $region16: #{tpu_custom_call.1} parent=1 // pred_region
      %39 = dma.done [#allocation3], 128
    $region17: #{tpu_custom_call.1} parent=1 // pred_fallthru
      _
    // Predicated region
    $region18: #{tpu_custom_call.1} parent=1 // pred_check
      _
    $region19: #{tpu_custom_call.1} parent=1 // pred_check_branch
      %41 = sbr.rel (0) target = $region21
    $region20: #{tpu_custom_call.1} parent=1 // pred_region
      %42 = dma.done [#allocation6], 3072
    $region21: #{tpu_custom_call.1} parent=1 // pred_fallthru
      _
    %v44 = vld [vmem:[#allocation2] sm:$0xf]
    %v45 = vld [vmem:[#allocation2 + $0x4] sm:$0xf]
    %v46 = vld [vmem:[#allocation5] sm:$0xff]
    %v47 = vld [vmem:[#allocation5 + $0x8] sm:$0xf]
    %v48 = vld [vmem:[#allocation5 + $0xc] sm:$0xff]
    %v49 = vld [vmem:[#allocation5 + $0x14] sm:$0xf]
    %v50 = vld [vmem:[#allocation5 + $0x18] sm:$0xff]
    %v51 = vld [vmem:[#allocation5 + $0x20] sm:$0xf]
    %v52 = vld [vmem:[#allocation5 + $0x24] sm:$0xff]
    %v53 = vld [vmem:[#allocation5 + $0x2c] sm:$0xf]
    %v54 = vld [vmem:[#allocation5 + $0x30] sm:$0xff]
    %v55 = vld [vmem:[#allocation5 + $0x38] sm:$0xf]
    %v56 = vld [vmem:[#allocation5 + $0x3c] sm:$0xff]
    %v57 = vld [vmem:[#allocation5 + $0x44] sm:$0xf]
    %v58 = vld [vmem:[#allocation5 + $0x48] sm:$0xff]
    %v59 = vld [vmem:[#allocation5 + $0x50] sm:$0xf]
    %v60 = vld [vmem:[#allocation5 + $0x54] sm:$0xff]
    %v61 = vld [vmem:[#allocation5 + $0x5c] sm:$0xf]
    %v62 = vld [vmem:[#allocation5 + $0x60] sm:$0xff]
    %v63 = vld [vmem:[#allocation5 + $0x68] sm:$0xf]
    %v64 = vld [vmem:[#allocation5 + $0x6c] sm:$0xff]
    %v65 = vld [vmem:[#allocation5 + $0x74] sm:$0xf]
    %v66 = vld [vmem:[#allocation5 + $0x78] sm:$0xff]
    %v67 = vld [vmem:[#allocation5 + $0x80] sm:$0xf]
    %v68 = vld [vmem:[#allocation5 + $0x84] sm:$0xff]
    %v69 = vld [vmem:[#allocation5 + $0x8c] sm:$0xf]
    %v70 = vld [vmem:[#allocation5 + $0x90] sm:$0xff]
    %v71 = vld [vmem:[#allocation5 + $0x98] sm:$0xf]
    %v72 = vld [vmem:[#allocation5 + $0x9c] sm:$0xff]
    %v73 = vld [vmem:[#allocation5 + $0xa4] sm:$0xf]
    %v74 = vld [vmem:[#allocation5 + $0xa8] sm:$0xff]
    %v75 = vld [vmem:[#allocation5 + $0xb0] sm:$0xf]
    %v76 = vld [vmem:[#allocation5 + $0xb4] sm:$0xff]
    %v77 = vld [vmem:[#allocation5 + $0xbc] sm:$0xf]
    %v78 = vld [vmem:[%s2] sm:$0x7]
    %v80 = vlaneseq
    %v81 = vshrl.u32 %v80, 7
    %v82 = vsub.s32 0, %v81
    %v83 = vrot.slane %v78, %v82
    %v84 = vlaneseq
    %v85 = vshrl.u32 %v84, 7
    %v86 = vsub.s32 1, %v85
    %v87 = vrot.slane %v78, %v86
    %v88 = vlaneseq
    %v89 = vshrl.u32 %v88, 7
    %v90 = vsub.s32 2, %v89
    %v91 = vrot.slane %v78, %v90
    %v97 = vunpack.c.l.b16 %v44
    %v98 = vunpack.c.l.b16 %v45
    %v99 = vpack.c.b16 %v98, %v97
    %v133 = vunpack.c.l.b16 %v46
    %v134 = vunpack.c.h.b16 %v46
    %v135 = vunpack.c.l.b16 %v47
    %v136 = vunpack.c.l.b16 %v48
    %v137 = vunpack.c.h.b16 %v48
    %v138 = vunpack.c.l.b16 %v49
    %v139 = vunpack.c.l.b16 %v50
    %v140 = vunpack.c.h.b16 %v50
    %v141 = vunpack.c.l.b16 %v51
    %v142 = vunpack.c.l.b16 %v52
    %v143 = vunpack.c.h.b16 %v52
    %v144 = vunpack.c.l.b16 %v53
    %v145 = vunpack.c.l.b16 %v54
    %v146 = vunpack.c.h.b16 %v54
    %v147 = vunpack.c.l.b16 %v55
    %v148 = vunpack.c.l.b16 %v56
    %v149 = vunpack.c.h.b16 %v56
    %v150 = vunpack.c.l.b16 %v57
    %v151 = vunpack.c.l.b16 %v58
    %v152 = vunpack.c.h.b16 %v58
    %v153 = vunpack.c.l.b16 %v59
    %v154 = vunpack.c.l.b16 %v60
    %v155 = vunpack.c.h.b16 %v60
    %v156 = vunpack.c.l.b16 %v61
    %v157 = vunpack.c.l.b16 %v62
    %v158 = vunpack.c.h.b16 %v62
    %v159 = vunpack.c.l.b16 %v63
    %v160 = vunpack.c.l.b16 %v64
    %v161 = vunpack.c.h.b16 %v64
    %v162 = vunpack.c.l.b16 %v65
    %v163 = vunpack.c.l.b16 %v66
    %v164 = vunpack.c.h.b16 %v66
    %v165 = vunpack.c.l.b16 %v67
    %v166 = vunpack.c.l.b16 %v68
    %v167 = vunpack.c.h.b16 %v68
    %v168 = vunpack.c.l.b16 %v69
    %v169 = vunpack.c.l.b16 %v70
    %v170 = vunpack.c.h.b16 %v70
    %v171 = vunpack.c.l.b16 %v71
    %v172 = vunpack.c.l.b16 %v72
    %v173 = vunpack.c.h.b16 %v72
    %v174 = vunpack.c.l.b16 %v73
    %v175 = vunpack.c.l.b16 %v74
    %v176 = vunpack.c.h.b16 %v74
    %v177 = vunpack.c.l.b16 %v75
    %v178 = vunpack.c.l.b16 %v76
    %v179 = vunpack.c.h.b16 %v76
    %v180 = vunpack.c.l.b16 %v77
    %v181 = vpack.c.b16 %v136, %v133
    %v182 = vpack.c.b16 %v137, %v134
    %v183 = vpack.c.b16 %v138, %v135
    %v184 = vpack.c.b16 %v142, %v139
    %v185 = vpack.c.b16 %v143, %v140
    %v186 = vpack.c.b16 %v144, %v141
    %v187 = vpack.c.b16 %v148, %v145
    %v188 = vpack.c.b16 %v149, %v146
    %v189 = vpack.c.b16 %v150, %v147
    %v190 = vpack.c.b16 %v154, %v151
    %v191 = vpack.c.b16 %v155, %v152
    %v192 = vpack.c.b16 %v156, %v153
    %v193 = vpack.c.b16 %v160, %v157
    %v194 = vpack.c.b16 %v161, %v158
    %v195 = vpack.c.b16 %v162, %v159
    %v196 = vpack.c.b16 %v166, %v163
    %v197 = vpack.c.b16 %v167, %v164
    %v198 = vpack.c.b16 %v168, %v165
    %v199 = vpack.c.b16 %v172, %v169
    %v200 = vpack.c.b16 %v173, %v170
    %v201 = vpack.c.b16 %v174, %v171
    %v202 = vpack.c.b16 %v178, %v175
    %v203 = vpack.c.b16 %v179, %v176
    %v204 = vpack.c.b16 %v180, %v177
    %229 = vmatprep.subr.bf16.mxu0 %v182
    %230 = vmatpush1.bf16.msra.mxu0 %v181
    %231 = vmatprep.subr.bf16.mxu0 %v185
    %232 = vmatpush1.bf16.msra.mxu0 %v184
    %233 = vmatprep.subr.bf16.mxu0 %v188
    %234 = vmatpush1.bf16.msra.mxu0 %v187
    %235 = vmatprep.subr.bf16.mxu0 %v191
    %236 = vmatpush1.bf16.msra.mxu0 %v190
    %237 = vmatprep.subr.bf16.mxu0 %v194
    %238 = vmatpush1.bf16.msra.mxu0 %v193
    %239 = vmatprep.subr.bf16.mxu0 %v197
    %240 = vmatpush1.bf16.msra.mxu0 %v196
    %241 = vmatprep.subr.bf16.mxu0 %v200
    %242 = vmatpush1.bf16.msra.mxu0 %v199
    %243 = vmatprep.subr.bf16.mxu0 %v203
    %244 = vmatpush1.bf16.msra.mxu0 %v202
    %245 = vmatprep.subr.bf16.mxu0 0
    %246 = vmatpush1.bf16.msra.mxu0 0
    %247 = vmatprep.subr.bf16.mxu0 0
    %248 = vmatpush1.bf16.msra.mxu0 0
    %249 = vmatprep.subr.bf16.mxu0 0
    %250 = vmatpush1.bf16.msra.mxu0 0
    %251 = vmatprep.subr.bf16.mxu0 0
    %252 = vmatpush1.bf16.msra.mxu0 0
    %253 = vmatprep.subr.bf16.mxu0 0
    %254 = vmatpush1.bf16.msra.mxu0 0
    %255 = vmatprep.subr.bf16.mxu0 0
    %256 = vmatpush1.bf16.msra.mxu0 0
    %257 = vmatprep.subr.bf16.mxu0 0
    %258 = vmatpush1.bf16.msra.mxu0 0
    %259 = vmatprep.subr.bf16.mxu0 0
    %260 = vmatpush1.bf16.msra.mxu0 0
    %261 = vmatprep.mubr.bf16.mxu0 0
    %262 = vmatmul.mubr.bf16.gmra.mrb[0].mxu0 %v99
    %v263 = vpop.f32.mrb[0].mxu0
    %v264 = vadd.f32 %v83, %v263
    %v265 = vpop.f32.mrb[0].mxu0
    %v266 = vadd.f32 %v87, %v265
    %v267 = vpop.f32.mrb[0].mxu0
    %v268 = vadd.f32 %v83, %v267
    %v269 = vpop.f32.mrb[0].mxu0
    %v270 = vadd.f32 %v87, %v269
    %271 = vdwg.mxu0
    %272 = vmatprep.subr.bf16.mxu0 0
    %273 = vmatpush1.bf16.msra.mxu0 %v183
    %274 = vmatprep.subr.bf16.mxu0 0
    %275 = vmatpush1.bf16.msra.mxu0 %v186
    %276 = vmatprep.subr.bf16.mxu0 0
    %277 = vmatpush1.bf16.msra.mxu0 %v189
    %278 = vmatprep.subr.bf16.mxu0 0
    %279 = vmatpush1.bf16.msra.mxu0 %v192
    %280 = vmatprep.subr.bf16.mxu0 0
    %281 = vmatpush1.bf16.msra.mxu0 %v195
    %282 = vmatprep.subr.bf16.mxu0 0
    %283 = vmatpush1.bf16.msra.mxu0 %v198
    %284 = vmatprep.subr.bf16.mxu0 0
    %285 = vmatpush1.bf16.msra.mxu0 %v201
    %286 = vmatprep.subr.bf16.mxu0 0
    %287 = vmatpush1.bf16.msra.mxu0 %v204
    %288 = vmatprep.subr.bf16.mxu0 0
    %289 = vmatpush1.bf16.msra.mxu0 0
    %290 = vmatprep.subr.bf16.mxu0 0
    %291 = vmatpush1.bf16.msra.mxu0 0
    %292 = vmatprep.subr.bf16.mxu0 0
    %293 = vmatpush1.bf16.msra.mxu0 0
    %294 = vmatprep.subr.bf16.mxu0 0
    %295 = vmatpush1.bf16.msra.mxu0 0
    %296 = vmatprep.subr.bf16.mxu0 0
    %297 = vmatpush1.bf16.msra.mxu0 0
    %298 = vmatprep.subr.bf16.mxu0 0
    %299 = vmatpush1.bf16.msra.mxu0 0
    %300 = vmatprep.subr.bf16.mxu0 0
    %301 = vmatpush1.bf16.msra.mxu0 0
    %302 = vmatprep.subr.bf16.mxu0 0
    %303 = vmatpush1.bf16.msra.mxu0 0
    %304 = vmatprep.mubr.bf16.mxu0 0
    %305 = vmatmul.mubr.bf16.gmra.mrb[0].mxu0 %v99
    %v306 = vpop.f32.mrb[0].mxu0
    %v307 = vadd.f32 %v91, %v306
    %v308 = vpop.f32.mrb[0].mxu0
    %v309 = vpop.f32.mrb[0].mxu0
    %v310 = vadd.f32 %v91, %v309
    %v311 = vpop.f32.mrb[0].mxu0
    %312 = vdwg.mxu0
    %v313 = vmul.f32 %v264, 0.17677669
    %v314 = vmul.f32 %v268, 0.17677669
    %v315 = vpack.c.bf16 %v314, %v313
    %v317 = vunpack.c.l.b16 %v315
    %v318 = vunpack.c.h.b16 %v315
    %v319 = vpack.c.b16 %v317, %v317
    %v320 = vpack.c.b16 %v318, %v318
    %323 = vst [vmem:[#allocation7] sm:$0xf] %v319
    %324 = vst [vmem:[#allocation7 + $0xc] sm:$0xf] %v320
    %v325 = vpack.c.bf16 %v270, %v266
    %v326 = vpack.c.bf16 %v310, %v307
    %v329 = vunpack.c.l.b16 %v325
    %v330 = vunpack.c.l.b16 %v326
    %v331 = vunpack.c.h.b16 %v325
    %v332 = vunpack.c.h.b16 %v326
    %v333 = vpack.c.b16 %v330, %v329
    %v334 = vpack.c.b16 %v332, %v331
    %337 = vst [vmem:[#allocation7 + $0x4] sm:$0xff] %v333
    %338 = vst [vmem:[#allocation7 + $0x10] sm:$0xff] %v334
    // Predicated region
    $region22: #{tpu_custom_call.1} parent=1 // pred_check
      _
    $region23: #{tpu_custom_call.1} parent=1 // pred_check_branch
      %340 = sbr.rel (0) target = $region25
    $region24: #{tpu_custom_call.1} parent=1 // pred_region
      %s342 = ssub.s32 384, 384
      %343 = vsyncadd [#allocation4], %s342
      %s344 = sshll.u32 [#allocation7], 4
      %s345 = int_to_ptr.vmem [resolvable:$true] %s344
      %350 = dma.vmem_to_hbm [thread:$0]  %s345, 384, %s3, [#allocation4], 192, 192, 12
    $region25: #{tpu_custom_call.1} parent=1 // pred_fallthru
      _
    // Predicated region
    $region26: #{tpu_custom_call.1} parent=1 // pred_check
      _
    $region27: #{tpu_custom_call.1} parent=1 // pred_check_branch
      %352 = sbr.rel (0) target = $region29
    $region28: #{tpu_custom_call.1} parent=1 // pred_region
      %353 = dma.done [#allocation4], 384
    $region29: #{tpu_custom_call.1} parent=1 // pred_fallthru
      _
    %354 = vsyncpa [#allocation3], 1
    %355 = vsyncpa [#allocation6], 1
    %356 = vsyncpa [#allocation4], 1

</llo_original>
